<compile_context>
chip_gen: v7x
topology: tpu7x:2x2x1
jax: 0.10.0
libtpu: 0.0.40
codegen_flags: <defaults>
</compile_context>

<pallas_src>
import jax
import jax.numpy as jnp
from jax.experimental import pallas as pl
from jax.experimental.pallas import tpu as pltpu


def _round_up(x, m):
    return (x + m - 1) // m * m


_LANE = 128
_VMEM_BUDGET = 20 * 1024 * 1024   # per-kernel footprint target (safe on v7x 64 MiB)
_VMEM_LIMIT = 32 * 1024 * 1024    # raised above v5e's 16 MiB scoped default


def _choose_batch_tile(batch):
    """Batch tile: multiple of 16 (bf16 sublanes).  Mid-size batches get two
    tiles so the 'parallel' batch axis can feed both v7x TensorCores; large
    batches use 512-row tiles to cut w1 re-streaming."""
    b16 = _round_up(batch, 16)
    if b16 <= 32:
        return b16
    if b16 <= 1024:
        return _round_up((b16 + 1) // 2, 16)
    return 512


def _choose_k_tile(din_pad, tb, e_pad, c_pad):
    """K tile: multiple of 128 that divides din_pad (no extra K padding).
    Collapses the K axis entirely (tk = din_pad, w1 resident, nk = 1) when the
    VMEM footprint allows; otherwise the largest divisor <= 4096 that fits."""
    def footprint(tk):
        return (2 * (tb * tk + tk * e_pad) * 2                     # dbl-buf bf16 x, w1
                + tb * e_pad * 4                                    # f32 accumulator
                + 2 * tb * _LANE * 4                                # dbl-buf f32 nll out
                + 2 * (e_pad * c_pad * 2 + (e_pad + c_pad) * 4 + tb * 4))  # w2/b1/b2/labels
    if footprint(din_pad) <= _VMEM_BUDGET:
        return din_pad
    n128 = din_pad // _LANE
    for g in range(min(n128, 32), 0, -1):                           # tk <= 4096
        if n128 % g == 0 and footprint(g * _LANE) <= _VMEM_BUDGET:
            return g * _LANE
    return _LANE


# ---------------------------------------------------------------------------
# Kernel: fused backbone(Linear+ReLU) -> head(Linear) -> softmax-CE (per row)
# grid = (batch_tiles, k_tiles); K is the reduction ("arbitrary") axis.
# ---------------------------------------------------------------------------
def classification_kernel(x_ref, w1_ref, b1_ref, w2_ref, b2_ref, labels_ref,
                          nll_ref, acc_ref):
    k = pl.program_id(1)

    # Backbone partial matmul.  x/w1 are bf16 (1/255 already folded into w1),
    # accumulation in f32 on the MXU.
    part = jnp.dot(x_ref[...], w1_ref[...], preferred_element_type=jnp.float32)

    @pl.when(k == 0)
    def _first():
        acc_ref[...] = part            # no zero-fill + add on the first K step

    @pl.when(k > 0)
    def _accumulate():
        acc_ref[...] += part

    # Epilogue only on the last K step.  NOTE: relies on K being the innermost
    # grid axis (output block index depends only on i) — do not reorder grid.
    @pl.when(k == pl.num_programs(1) - 1)
    def _epilogue():
        # Backbone bias + ReLU (f32 VPU math — v5e-safe).
        h = jnp.maximum(acc_ref[...] + b1_ref[...], 0.0)            # (TB, E_pad)
        # Classification head (bf16 MXU operands, f32 accumulation).
        logits = jnp.dot(h.astype(jnp.bfloat16), w2_ref[...],
                         preferred_element_type=jnp.float32) + b2_ref[...]
        # Softmax cross entropy per example.  Padded classes carry a -1e30
        # f32 bias so exp(logit - m) underflows to exactly 0; the label
        # compare below never selects a padded column (labels < num_classes).
        m = jnp.max(logits, axis=-1, keepdims=True)
        lse = m + jnp.log(jnp.sum(jnp.exp(logits - m), axis=-1, keepdims=True))
        labels = labels_ref[...]                                    # (TB, 1) int32
        cols = jax.lax.broadcasted_iota(jnp.int32, logits.shape, 1)
        picked = jnp.sum(jnp.where(cols == labels, logits, 0.0),
                         axis=-1, keepdims=True)
        nll = lse - picked                                          # (TB, 1)
        # Lane-dense (TB, 128) store — avoids masked vst on a 1-wide output.
        nll_ref[...] = jnp.broadcast_to(nll, nll_ref.shape)


# ---------------------------------------------------------------------------
# One-time parameter prep: fold pretreat's 1/255 into w1, lane-pad to
# 128-aligned MXU shapes, cast matmul operands to bf16.  Din is padded to 128
# only; the K tile (a divisor of din_pad) is owned by the forward wrapper.
# ---------------------------------------------------------------------------
def prepare_params(w1, b1, w2, b2):
    din, e = w1.shape
    _, c = w2.shape
    # e_pad/c_pad = 128 keeps traffic minimal while memory-bound; bump to 256
    # multiples on v6e/v7x only if this kernel ever turns compute-bound.
    e_pad = _round_up(max(e, _LANE), _LANE)
    c_pad = _round_up(max(c, _LANE), _LANE)
    din_pad = _round_up(din, _LANE)

    w1s = w1.astype(jnp.float32) / 255.0      # fold the pretreat normalization
    w1p = jnp.zeros((din_pad, e_pad), jnp.float32).at[:din, :e].set(w1s)
    b1p = jnp.zeros((1, e_pad), jnp.float32).at[0, :e].set(b1)
    w2p = jnp.zeros((e_pad, c_pad), jnp.float32).at[:e, :c].set(w2)
    # Padded classes: huge negative bias (f32, never -inf) -> vanish from lse.
    b2p = jnp.full((1, c_pad), -1e30, jnp.float32).at[0, :c].set(b2)

    return {
        "w1": w1p.astype(jnp.bfloat16),
        "b1": b1p,
        "w2": w2p.astype(jnp.bfloat16),
        "b2": b2p,
    }


# ---------------------------------------------------------------------------
# Forward: returns the scalar cross-entropy loss (mean over the true batch),
# mirroring Classification.forward.
# ---------------------------------------------------------------------------
@jax.jit
def classification_forward(x_nchw, labels, params):
    w1, b1, w2, b2 = params["w1"], params["b1"], params["w2"], params["b2"]
    batch = x_nchw.shape[0]
    din = 1
    for d in x_nchw.shape[1:]:
        din *= d
    din_pad, e_pad = w1.shape
    c_pad = w2.shape[1]

    # Tile choices (static at trace time) — single source of truth.
    tb = _choose_batch_tile(batch)
    b_pad = _round_up(batch, tb)
    tk = _choose_k_tile(din_pad, tb, e_pad, c_pad)
    assert din_pad % tk == 0 and tk % _LANE == 0
    nb, nk = b_pad // tb, din_pad // tk

    # Glue: flatten NCHW, cast to bf16 FIRST, pad only if needed.
    x_flat = x_nchw.reshape(batch, din).astype(jnp.bfloat16)
    if batch == b_pad and din == din_pad:
        x_in = x_flat
    else:
        x_in = jnp.zeros((b_pad, din_pad), jnp.bfloat16).at[:batch, :din].set(x_flat)

    # Tiny int32 label column; padded rows (label 0) are sliced off below.
    labels_in = jnp.zeros((b_pad, 1), jnp.int32).at[:batch, 0].set(
        labels.astype(jnp.int32))

    nll = pl.pallas_call(
        classification_kernel,
        out_shape=jax.ShapeDtypeStruct((b_pad, _LANE), jnp.float32),
        grid_spec=pltpu.PrefetchScalarGridSpec(
            num_scalar_prefetch=0,
            grid=(nb, nk),
            in_specs=[
                pl.BlockSpec((tb, tk), lambda i, k: (i, k)),        # x (bf16)
                pl.BlockSpec((tk, e_pad), lambda i, k: (k, 0)),     # w1 (bf16)
                pl.BlockSpec((1, e_pad), lambda i, k: (0, 0)),      # b1 (f32)
                pl.BlockSpec((e_pad, c_pad), lambda i, k: (0, 0)),  # w2 (bf16)
                pl.BlockSpec((1, c_pad), lambda i, k: (0, 0)),      # b2 (f32)
                pl.BlockSpec((tb, 1), lambda i, k: (i, 0)),         # labels (i32)
            ],
            out_specs=pl.BlockSpec((tb, _LANE), lambda i, k: (i, 0)),
            scratch_shapes=[pltpu.VMEM((tb, e_pad), jnp.float32)],
        ),
        compiler_params=pltpu.CompilerParams(
            dimension_semantics=("parallel", "arbitrary"),
            vmem_limit_bytes=_VMEM_LIMIT),
    )(x_in, w1, b1, w2, b2, labels_in)

    # Mean over the true batch (padded rows dropped here) — trivial reduction.
    return jnp.sum(nll[:batch, 0]) / jnp.float32(batch)


if __name__ == "__main__":
    # Small shapes consistent with the module's forward pass.
    B, C, H, W = 2, 4, 16, 16
    embed_dim = 32
    num_classes = 8
    Din = C * H * W

    key = jax.random.PRNGKey(0)
    k_x, k_lab, k_w1, k_b1, k_w2, k_b2 = jax.random.split(key, 6)

    # Image-like input in [0, 255] (pretreat /255 is folded into w1).
    x = jax.random.uniform(k_x, (B, C, H, W), jnp.float32, 0.0, 255.0)
    labels = jax.random.randint(k_lab, (B,), 0, num_classes, jnp.int32)

    # Deterministic parameter init (synthetic; not a checkpoint load).
    # TODO(synk): the spec's backbone/task_head are user-supplied nn.Modules;
    # modeled here as a Linear+ReLU backbone and a Linear classification head.
    w1 = 0.02 * jax.random.normal(k_w1, (Din, embed_dim), jnp.float32)
    b1 = 0.02 * jax.random.normal(k_b1, (embed_dim,), jnp.float32)
    w2 = 0.02 * jax.random.normal(k_w2, (embed_dim, num_classes), jnp.float32)
    b2 = 0.02 * jax.random.normal(k_b2, (num_classes,), jnp.float32)

    params = prepare_params(w1, b1, w2, b2)
    loss = classification_forward(x, labels, params)
    jax.block_until_ready(loss)

    # Pure-JAX reference of the same math (same bf16 casts, f32 accumulation).
    xf = x.reshape(B, -1).astype(jnp.bfloat16)
    w1b = (w1 / 255.0).astype(jnp.bfloat16)
    h_ref = jnp.maximum(
        jnp.dot(xf, w1b, preferred_element_type=jnp.float32) + b1, 0.0)
    logits_ref = jnp.dot(h_ref.astype(jnp.bfloat16), w2.astype(jnp.bfloat16),
                         preferred_element_type=jnp.float32) + b2
    ref = jnp.mean(
        jax.nn.logsumexp(logits_ref, axis=-1)
        - jnp.take_along_axis(logits_ref, labels[:, None], axis=-1)[:, 0])

    assert jnp.isfinite(loss), loss
    assert jnp.allclose(loss, ref, rtol=2e-3, atol=2e-3), (loss, ref)

    print("KERNEL_OK")
</pallas_src>

<mosaic_0001>
module attributes {stable_mosaic.version = 11 : i64} {
  func.func @classification_kernel(%arg0: i32, %arg1: i32, %arg2: memref<16x1024xbf16, #tpu.memory_space<vmem>>, %arg3: memref<1024x128xbf16, #tpu.memory_space<vmem>>, %arg4: memref<1x128xf32, #tpu.memory_space<vmem>>, %arg5: memref<128x128xbf16, #tpu.memory_space<vmem>>, %arg6: memref<1x128xf32, #tpu.memory_space<vmem>>, %arg7: memref<16x1xi32, #tpu.memory_space<vmem>>, %arg8: memref<16x128xf32, #tpu.memory_space<vmem>>, %arg9: memref<16x128xf32, #tpu.memory_space<vmem>>) attributes {dimension_semantics = [#tpu.dimension_semantics<parallel>, #tpu.dimension_semantics<arbitrary>], iteration_bounds = array<i64: 1, 1>, scalar_prefetch = 0 : i64, scratch_operands = 1 : i64, tpu.core_type = #tpu.core_type<tc>, window_params = [{transform_indices = @transform_0, window_bounds = array<i64: 16, 1024>}, {transform_indices = @transform_1, window_bounds = array<i64: 1024, 128>}, {pipeline_mode = #tpu.pipeline_mode<synchronous>, transform_indices = @transform_2, window_bounds = array<i64: 1, 128>}, {pipeline_mode = #tpu.pipeline_mode<synchronous>, transform_indices = @transform_3, window_bounds = array<i64: 128, 128>}, {pipeline_mode = #tpu.pipeline_mode<synchronous>, transform_indices = @transform_4, window_bounds = array<i64: 1, 128>}, {transform_indices = @transform_5, window_bounds = array<i64: 16, 1>}, {transform_indices = @transform_6, window_bounds = array<i64: 16, 128>}]} {
    %c0 = arith.constant 0 : index
    %c0_0 = arith.constant 0 : index
    %0 = vector.load %arg2[%c0, %c0_0] : memref<16x1024xbf16, #tpu.memory_space<vmem>>, vector<16x1024xbf16>
    %c0_1 = arith.constant 0 : index
    %c0_2 = arith.constant 0 : index
    %1 = vector.load %arg3[%c0_1, %c0_2] : memref<1024x128xbf16, #tpu.memory_space<vmem>>, vector<1024x128xbf16>
    %cst = arith.constant dense<0.000000e+00> : vector<16x128xf32>
    %2 = tpu.matmul %0, %1, %cst {dimension_numbers = #tpu.dot_dimension_numbers<[1], [0], [0], [1], [0, 0, 1, 1], [], []>} : vector<16x1024xbf16>, vector<1024x128xbf16>, vector<16x128xf32> -> vector<16x128xf32>
    %c0_i32 = arith.constant 0 : i32
    %3 = arith.cmpi eq, %arg1, %c0_i32 : i32
    %4 = arith.extui %3 : i1 to i32
    %c0_i32_3 = arith.constant 0 : i32
    %5 = arith.cmpi ne, %4, %c0_i32_3 : i32
    scf.if %5 {
      %c0_8 = arith.constant 0 : index
      %c0_9 = arith.constant 0 : index
      %12 = vector.load %arg9[%c0_8, %c0_9] : memref<16x128xf32, #tpu.memory_space<vmem>>, vector<16x128xf32>
      tpu.vector_store %arg9[%c0_8, %c0_9], %2 {strides = array<i32>} : memref<16x128xf32, #tpu.memory_space<vmem>>, vector<16x128xf32>,
    } else {
    }
    %c0_i32_4 = arith.constant 0 : i32
    %6 = arith.cmpi sgt, %arg1, %c0_i32_4 : i32
    %7 = arith.extui %6 : i1 to i32
    %c0_i32_5 = arith.constant 0 : i32
    %8 = arith.cmpi ne, %7, %c0_i32_5 : i32
    scf.if %8 {
      %c0_8 = arith.constant 0 : index
      %c0_9 = arith.constant 0 : index
      %12 = vector.load %arg9[%c0_8, %c0_9] : memref<16x128xf32, #tpu.memory_space<vmem>>, vector<16x128xf32>
      %13 = arith.addf %12, %2 : vector<16x128xf32>
      %c0_10 = arith.constant 0 : index
      %c0_11 = arith.constant 0 : index
      %14 = vector.load %arg9[%c0_10, %c0_11] : memref<16x128xf32, #tpu.memory_space<vmem>>, vector<16x128xf32>
      tpu.vector_store %arg9[%c0_10, %c0_11], %13 {strides = array<i32>} : memref<16x128xf32, #tpu.memory_space<vmem>>, vector<16x128xf32>,
    } else {
    }
    %c0_i32_6 = arith.constant 0 : i32
    %9 = arith.cmpi eq, %arg1, %c0_i32_6 : i32
    %10 = arith.extui %9 : i1 to i32
    %c0_i32_7 = arith.constant 0 : i32
    %11 = arith.cmpi ne, %10, %c0_i32_7 : i32
    scf.if %11 {
      %c0_8 = arith.constant 0 : index
      %c0_9 = arith.constant 0 : index
      %12 = vector.load %arg9[%c0_8, %c0_9] : memref<16x128xf32, #tpu.memory_space<vmem>>, vector<16x128xf32>
      %c0_10 = arith.constant 0 : index
      %c0_11 = arith.constant 0 : index
      %13 = vector.load %arg4[%c0_10, %c0_11] : memref<1x128xf32, #tpu.memory_space<vmem>>, vector<1x128xf32>
      %14 = vector.broadcast %13 : vector<1x128xf32> to vector<16x128xf32>
      %15 = arith.addf %12, %14 : vector<16x128xf32>
      %cst_12 = arith.constant 0.000000e+00 : f32
      %16 = vector.broadcast %cst_12 : f32 to vector<16x128xf32>
      %17 = arith.maximumf %15, %16 : vector<16x128xf32>
      %18 = arith.truncf %17 : vector<16x128xf32> to vector<16x128xbf16>
      %c0_13 = arith.constant 0 : index
      %c0_14 = arith.constant 0 : index
      %19 = vector.load %arg5[%c0_13, %c0_14] : memref<128x128xbf16, #tpu.memory_space<vmem>>, vector<128x128xbf16>
      %cst_15 = arith.constant dense<0.000000e+00> : vector<16x128xf32>
      %20 = tpu.matmul %18, %19, %cst_15 {dimension_numbers = #tpu.dot_dimension_numbers<[1], [0], [0], [1], [0, 0, 1, 1], [], []>} : vector<16x128xbf16>, vector<128x128xbf16>, vector<16x128xf32> -> vector<16x128xf32>
      %c0_16 = arith.constant 0 : index
      %c0_17 = arith.constant 0 : index
      %21 = vector.load %arg6[%c0_16, %c0_17] : memref<1x128xf32, #tpu.memory_space<vmem>>, vector<1x128xf32>
      %22 = vector.broadcast %21 : vector<1x128xf32> to vector<16x128xf32>
      %23 = arith.addf %20, %22 : vector<16x128xf32>
      %cst_18 = arith.constant dense<0xFF800000> : vector<16xf32>
      %24 = vector.multi_reduction <maximumf>, %23, %cst_18 [1] : vector<16x128xf32> to vector<16xf32>
      %25 = vector.shape_cast %24 : vector<16xf32> to vector<16x1xf32>
      %26 = vector.broadcast %25 : vector<16x1xf32> to vector<16x128xf32>
      %27 = arith.subf %23, %26 : vector<16x128xf32>
      %28 = math.exp %27 : vector<16x128xf32>
      %cst_19 = arith.constant dense<0.000000e+00> : vector<16xf32>
      %29 = vector.multi_reduction <add>, %28, %cst_19 [1] : vector<16x128xf32> to vector<16xf32>
      %30 = vector.shape_cast %29 : vector<16xf32> to vector<16x1xf32>
      %31 = math.log %30 : vector<16x1xf32>
      %32 = arith.addf %25, %31 : vector<16x1xf32>
      %c0_20 = arith.constant 0 : index
      %c0_21 = arith.constant 0 : index
      %33 = vector.load %arg7[%c0_20, %c0_21] : memref<16x1xi32, #tpu.memory_space<vmem>>, vector<16x1xi32>
      %34 = tpu.iota {dimensions = array<i32: 1>} : vector<16x128xi32>
      %35 = vector.broadcast %33 : vector<16x1xi32> to vector<16x128xi32>
      %36 = arith.cmpi eq, %34, %35 : vector<16x128xi32>
      %cst_22 = arith.constant 0.000000e+00 : f32
      %37 = vector.broadcast %cst_22 : f32 to vector<16x128xf32>
      %38 = arith.select %36, %23, %37 : vector<16x128xi1>, vector<16x128xf32>
      %cst_23 = arith.constant dense<0.000000e+00> : vector<16xf32>
      %39 = vector.multi_reduction <add>, %38, %cst_23 [1] : vector<16x128xf32> to vector<16xf32>
      %40 = vector.shape_cast %39 : vector<16xf32> to vector<16x1xf32>
      %41 = arith.subf %32, %40 : vector<16x1xf32>
      %42 = vector.shape_cast %41 : vector<16x1xf32> to vector<16x1xf32>
      %43 = vector.broadcast %42 : vector<16x1xf32> to vector<16x128xf32>
      %c0_24 = arith.constant 0 : index
      %c0_25 = arith.constant 0 : index
      %44 = vector.load %arg8[%c0_24, %c0_25] : memref<16x128xf32, #tpu.memory_space<vmem>>, vector<16x128xf32>
      tpu.vector_store %arg8[%c0_24, %c0_25], %43 {strides = array<i32>} : memref<16x128xf32, #tpu.memory_space<vmem>>, vector<16x128xf32>,
    } else {
    }
    return
  }
  func.func @transform_0(%arg0: i32, %arg1: i32) -> (i32, i32) {
    %c0_i32 = arith.constant 0 : i32
    return %arg0, %arg1 : i32, i32
  }
  func.func @transform_1(%arg0: i32, %arg1: i32) -> (i32, i32) {
    %c0_i32 = arith.constant 0 : i32
    %c0_i32_0 = arith.constant 0 : i32
    return %arg1, %c0_i32 : i32, i32
  }
  func.func @transform_2(%arg0: i32, %arg1: i32) -> (i32, i32) {
    %c0_i32 = arith.constant 0 : i32
    %c0_i32_0 = arith.constant 0 : i32
    %c0_i32_1 = arith.constant 0 : i32
    return %c0_i32, %c0_i32_0 : i32, i32
  }
  func.func @transform_3(%arg0: i32, %arg1: i32) -> (i32, i32) {
    %c0_i32 = arith.constant 0 : i32
    %c0_i32_0 = arith.constant 0 : i32
    %c0_i32_1 = arith.constant 0 : i32
    return %c0_i32, %c0_i32_0 : i32, i32
  }
  func.func @transform_4(%arg0: i32, %arg1: i32) -> (i32, i32) {
    %c0_i32 = arith.constant 0 : i32
    %c0_i32_0 = arith.constant 0 : i32
    %c0_i32_1 = arith.constant 0 : i32
    return %c0_i32, %c0_i32_0 : i32, i32
  }
  func.func @transform_5(%arg0: i32, %arg1: i32) -> (i32, i32) {
    %c0_i32 = arith.constant 0 : i32
    %c0_i32_0 = arith.constant 0 : i32
    return %arg0, %c0_i32 : i32, i32
  }
  func.func @transform_6(%arg0: i32, %arg1: i32) -> (i32, i32) {
    %c0_i32 = arith.constant 0 : i32
    %c0_i32_0 = arith.constant 0 : i32
    return %arg0, %c0_i32 : i32, i32
  }
}

</mosaic_0001>

<llo_original>
// kernel: classification_forward.1
$region0: #{classification_forward.1}
  #allocation0 [shape = 'u32[]', space=smem, size = 0x4, offset = 0x4, fixed_abs, tag = 'smem constant byte address 0x4 - core index']
  #allocation1 [shape = 'u32[144,128]{1,0:T(1,128)}', space=vmem, size = 0x12000, scoped, tag = 'internal scratch']
  #allocation2 [shape = 'f32[16,128]{1,0:T(8,128)}', space=vmem, size = 0x2000, scoped, tag = 'scratch operand']
  %s0 = inlined_call_operand.vmem [shape: bf16[16,1024], index: 0, kind: input, shape index: {}]
  %s1 = inlined_call_operand.hbm [shape: bf16[1024,128], index: 1, kind: input, shape index: {}]
  %s2 = inlined_call_operand.vmem [shape: f32[1,128], index: 2, kind: input, shape index: {}]
  %s3 = inlined_call_operand.vmem [shape: bf16[128,128], index: 3, kind: input, shape index: {}]
  %s4 = inlined_call_operand.vmem [shape: f32[1,128], index: 4, kind: input, shape index: {}]
  %s5 = inlined_call_operand.vmem [shape: s32[16,1], index: 5, kind: input, shape index: {}]
  %s6 = inlined_call_operand.vmem [shape: f32[16,128], index: 6, kind: output, shape index: {}]
  %s7 = sld [smem:[#allocation0]]
  $region50: #{classification_forward.1} parent=0
    _
  %s9 = ssub.s32 1, %s7
  %s10 = scalar_select 0, %s9, %s7
  $region1: #{classification_forward.1} parent=0
    #allocation3 [shape = 'u8[262144]{0}', space=vmem, size = 0x40000, scoped, tag = 'input window, operand 1, single buffered']
    #allocation4 [shape = 's32[1]{0}', space=sflag, size = 0x4, scoped, tag = 'scoped memory for classification_forward.1']
    %11 = vsyncpa [#allocation4], 0
    // Predicated region
    $region2: #{classification_forward.1} parent=1 // pred_check
      _
    $region3: #{classification_forward.1} parent=1 // pred_check_branch
      %13 = sbr.rel (0) target = $region5
    $region4: #{classification_forward.1} parent=1 // pred_region
      _
    $region5: #{classification_forward.1} parent=1 // pred_fallthru
      _
    // Predicated region
    $region6: #{classification_forward.1} parent=1 // pred_check
      _
    $region7: #{classification_forward.1} parent=1 // pred_check_branch
      %15 = sbr.rel (0) target = $region9
    $region8: #{classification_forward.1} parent=1 // pred_region
      %s17 = ssub.s32 8192, 8192
      %18 = vsyncadd [#allocation4], %s17
      %s19 = sshll.u32 [#allocation3], 4
      %s20 = int_to_ptr.vmem [resolvable:$true] %s19
      %25 = dma.hbm_to_vmem [thread:$0]  %s1, 8192, %s20, [#allocation4], 64, 64, 4
    $region9: #{classification_forward.1} parent=1 // pred_fallthru
      _
    // Predicated region
    $region10: #{classification_forward.1} parent=1 // pred_check
      _
    $region11: #{classification_forward.1} parent=1 // pred_check_branch
      %27 = sbr.rel (0) target = $region13
    $region12: #{classification_forward.1} parent=1 // pred_region
      _
    $region13: #{classification_forward.1} parent=1 // pred_fallthru
      _
    // Predicated region
    $region14: #{classification_forward.1} parent=1 // pred_check
      _
    $region15: #{classification_forward.1} parent=1 // pred_check_branch
      %29 = sbr.rel (0) target = $region17
    $region16: #{classification_forward.1} parent=1 // pred_region
      _
    $region17: #{classification_forward.1} parent=1 // pred_fallthru
      _
    // Predicated region
    $region18: #{classification_forward.1} parent=1 // pred_check
      _
    $region19: #{classification_forward.1} parent=1 // pred_check_branch
      %31 = sbr.rel (0) target = $region21
    $region20: #{classification_forward.1} parent=1 // pred_region
      _
    $region21: #{classification_forward.1} parent=1 // pred_fallthru
      _
    // Predicated region
    $region22: #{classification_forward.1} parent=1 // pred_check
      _
    $region23: #{classification_forward.1} parent=1 // pred_check_branch
      %33 = sbr.rel (0) target = $region25
    $region24: #{classification_forward.1} parent=1 // pred_region
      _
    $region25: #{classification_forward.1} parent=1 // pred_fallthru
      _
    // Predicated region
    $region26: #{classification_forward.1} parent=1 // pred_check
      _
    $region27: #{classification_forward.1} parent=1 // pred_check_branch
      %35 = sbr.rel (0) target = $region29
    $region28: #{classification_forward.1} parent=1 // pred_region
      %36 = dma.done [#allocation4], 8192
    $region29: #{classification_forward.1} parent=1 // pred_fallthru
      _
    %v38 = vld [vmem:[%s0] sm:$0xff]
    %v39 = vld [vmem:[%s0 + $0x8] sm:$0xff]
    %v40 = vld [vmem:[%s0 + $0x10] sm:$0xff]
    %v41 = vld [vmem:[%s0 + $0x18] sm:$0xff]
    %v42 = vld [vmem:[%s0 + $0x20] sm:$0xff]
    %v43 = vld [vmem:[%s0 + $0x28] sm:$0xff]
    %v44 = vld [vmem:[%s0 + $0x30] sm:$0xff]
    %v45 = vld [vmem:[%s0 + $0x38] sm:$0xff]
    %v46 = vld [vmem:[#allocation3] sm:$0xf]
    %v47 = vld [vmem:[#allocation3 + $0x4] sm:$0xf]
    %v48 = vld [vmem:[#allocation3 + $0x8] sm:$0xf]
    %v49 = vld [vmem:[#allocation3 + $0xc] sm:$0xf]
    %v50 = vld [vmem:[#allocation3 + $0x10] sm:$0xf]
    %v51 = vld [vmem:[#allocation3 + $0x14] sm:$0xf]
    %v52 = vld [vmem:[#allocation3 + $0x18] sm:$0xf]
    %v53 = vld [vmem:[#allocation3 + $0x1c] sm:$0xf]
    %v54 = vld [vmem:[#allocation3 + $0x20] sm:$0xf]
    %v55 = vld [vmem:[#allocation3 + $0x24] sm:$0xf]
    %v56 = vld [vmem:[#allocation3 + $0x28] sm:$0xf]
    %v57 = vld [vmem:[#allocation3 + $0x2c] sm:$0xf]
    %v58 = vld [vmem:[#allocation3 + $0x30] sm:$0xf]
    %v59 = vld [vmem:[#allocation3 + $0x34] sm:$0xf]
    %v60 = vld [vmem:[#allocation3 + $0x38] sm:$0xf]
    %v61 = vld [vmem:[#allocation3 + $0x3c] sm:$0xf]
    %v62 = vld [vmem:[#allocation3 + $0x40] sm:$0xf]
    %v63 = vld [vmem:[#allocation3 + $0x44] sm:$0xf]
    %v64 = vld [vmem:[#allocation3 + $0x48] sm:$0xf]
    %v65 = vld [vmem:[#allocation3 + $0x4c] sm:$0xf]
    %v66 = vld [vmem:[#allocation3 + $0x50] sm:$0xf]
    %v67 = vld [vmem:[#allocation3 + $0x54] sm:$0xf]
    %v68 = vld [vmem:[#allocation3 + $0x58] sm:$0xf]
    %v69 = vld [vmem:[#allocation3 + $0x5c] sm:$0xf]
    %v70 = vld [vmem:[#allocation3 + $0x60] sm:$0xf]
    %v71 = vld [vmem:[#allocation3 + $0x64] sm:$0xf]
    %v72 = vld [vmem:[#allocation3 + $0x68] sm:$0xf]
    %v73 = vld [vmem:[#allocation3 + $0x6c] sm:$0xf]
    %v74 = vld [vmem:[#allocation3 + $0x70] sm:$0xf]
    %v75 = vld [vmem:[#allocation3 + $0x74] sm:$0xf]
    %v76 = vld [vmem:[#allocation3 + $0x78] sm:$0xf]
    %v77 = vld [vmem:[#allocation3 + $0x7c] sm:$0xf]
    %v78 = vld [vmem:[#allocation3 + $0x80] sm:$0xf]
    %v79 = vld [vmem:[#allocation3 + $0x84] sm:$0xf]
    %v80 = vld [vmem:[#allocation3 + $0x88] sm:$0xf]
    %v81 = vld [vmem:[#allocation3 + $0x8c] sm:$0xf]
    %v82 = vld [vmem:[#allocation3 + $0x90] sm:$0xf]
    %v83 = vld [vmem:[#allocation3 + $0x94] sm:$0xf]
    %v84 = vld [vmem:[#allocation3 + $0x98] sm:$0xf]
    %v85 = vld [vmem:[#allocation3 + $0x9c] sm:$0xf]
    %v86 = vld [vmem:[#allocation3 + $0xa0] sm:$0xf]
    %v87 = vld [vmem:[#allocation3 + $0xa4] sm:$0xf]
    %v88 = vld [vmem:[#allocation3 + $0xa8] sm:$0xf]
    %v89 = vld [vmem:[#allocation3 + $0xac] sm:$0xf]
    %v90 = vld [vmem:[#allocation3 + $0xb0] sm:$0xf]
    %v91 = vld [vmem:[#allocation3 + $0xb4] sm:$0xf]
    %v92 = vld [vmem:[#allocation3 + $0xb8] sm:$0xf]
    %v93 = vld [vmem:[#allocation3 + $0xbc] sm:$0xf]
    %v94 = vld [vmem:[#allocation3 + $0xc0] sm:$0xf]
    %v95 = vld [vmem:[#allocation3 + $0xc4] sm:$0xf]
    %v96 = vld [vmem:[#allocation3 + $0xc8] sm:$0xf]
    %v97 = vld [vmem:[#allocation3 + $0xcc] sm:$0xf]
    %v98 = vld [vmem:[#allocation3 + $0xd0] sm:$0xf]
    %v99 = vld [vmem:[#allocation3 + $0xd4] sm:$0xf]
    %v100 = vld [vmem:[#allocation3 + $0xd8] sm:$0xf]
    %v101 = vld [vmem:[#allocation3 + $0xdc] sm:$0xf]
    %v102 = vld [vmem:[#allocation3 + $0xe0] sm:$0xf]
    %v103 = vld [vmem:[#allocation3 + $0xe4] sm:$0xf]
    %v104 = vld [vmem:[#allocation3 + $0xe8] sm:$0xf]
    %v105 = vld [vmem:[#allocation3 + $0xec] sm:$0xf]
    %v106 = vld [vmem:[#allocation3 + $0xf0] sm:$0xf]
    %v107 = vld [vmem:[#allocation3 + $0xf4] sm:$0xf]
    %v108 = vld [vmem:[#allocation3 + $0xf8] sm:$0xf]
    %v109 = vld [vmem:[#allocation3 + $0xfc] sm:$0xf]
    %v110 = vld [vmem:[#allocation3 + $0x100] sm:$0xf]
    %v111 = vld [vmem:[#allocation3 + $0x104] sm:$0xf]
    %v112 = vld [vmem:[#allocation3 + $0x108] sm:$0xf]
    %v113 = vld [vmem:[#allocation3 + $0x10c] sm:$0xf]
    %v114 = vld [vmem:[#allocation3 + $0x110] sm:$0xf]
    %v115 = vld [vmem:[#allocation3 + $0x114] sm:$0xf]
    %v116 = vld [vmem:[#allocation3 + $0x118] sm:$0xf]
    %v117 = vld [vmem:[#allocation3 + $0x11c] sm:$0xf]
    %v118 = vld [vmem:[#allocation3 + $0x120] sm:$0xf]
    %v119 = vld [vmem:[#allocation3 + $0x124] sm:$0xf]
    %v120 = vld [vmem:[#allocation3 + $0x128] sm:$0xf]
    %v121 = vld [vmem:[#allocation3 + $0x12c] sm:$0xf]
    %v122 = vld [vmem:[#allocation3 + $0x130] sm:$0xf]
    %v123 = vld [vmem:[#allocation3 + $0x134] sm:$0xf]
    %v124 = vld [vmem:[#allocation3 + $0x138] sm:$0xf]
    %v125 = vld [vmem:[#allocation3 + $0x13c] sm:$0xf]
    %v126 = vld [vmem:[#allocation3 + $0x140] sm:$0xf]
    %v127 = vld [vmem:[#allocation3 + $0x144] sm:$0xf]
    %v128 = vld [vmem:[#allocation3 + $0x148] sm:$0xf]
    %v129 = vld [vmem:[#allocation3 + $0x14c] sm:$0xf]
    %v130 = vld [vmem:[#allocation3 + $0x150] sm:$0xf]
    %v131 = vld [vmem:[#allocation3 + $0x154] sm:$0xf]
    %v132 = vld [vmem:[#allocation3 + $0x158] sm:$0xf]
    %v133 = vld [vmem:[#allocation3 + $0x15c] sm:$0xf]
    %v134 = vld [vmem:[#allocation3 + $0x160] sm:$0xf]
    %v135 = vld [vmem:[#allocation3 + $0x164] sm:$0xf]
    %v136 = vld [vmem:[#allocation3 + $0x168] sm:$0xf]
    %v137 = vld [vmem:[#allocation3 + $0x16c] sm:$0xf]
    %v138 = vld [vmem:[#allocation3 + $0x170] sm:$0xf]
    %v139 = vld [vmem:[#allocation3 + $0x174] sm:$0xf]
    %v140 = vld [vmem:[#allocation3 + $0x178] sm:$0xf]
    %v141 = vld [vmem:[#allocation3 + $0x17c] sm:$0xf]
    %v142 = vld [vmem:[#allocation3 + $0x180] sm:$0xf]
    %v143 = vld [vmem:[#allocation3 + $0x184] sm:$0xf]
    %v144 = vld [vmem:[#allocation3 + $0x188] sm:$0xf]
    %v145 = vld [vmem:[#allocation3 + $0x18c] sm:$0xf]
    %v146 = vld [vmem:[#allocation3 + $0x190] sm:$0xf]
    %v147 = vld [vmem:[#allocation3 + $0x194] sm:$0xf]
    %v148 = vld [vmem:[#allocation3 + $0x198] sm:$0xf]
    %v149 = vld [vmem:[#allocation3 + $0x19c] sm:$0xf]
    %v150 = vld [vmem:[#allocation3 + $0x1a0] sm:$0xf]
    %v151 = vld [vmem:[#allocation3 + $0x1a4] sm:$0xf]
    %v152 = vld [vmem:[#allocation3 + $0x1a8] sm:$0xf]
    %v153 = vld [vmem:[#allocation3 + $0x1ac] sm:$0xf]
    %v154 = vld [vmem:[#allocation3 + $0x1b0] sm:$0xf]
    %v155 = vld [vmem:[#allocation3 + $0x1b4] sm:$0xf]
    %v156 = vld [vmem:[#allocation3 + $0x1b8] sm:$0xf]
    %v157 = vld [vmem:[#allocation3 + $0x1bc] sm:$0xf]
    %v158 = vld [vmem:[#allocation3 + $0x1c0] sm:$0xf]
    %v159 = vld [vmem:[#allocation3 + $0x1c4] sm:$0xf]
    %v160 = vld [vmem:[#allocation3 + $0x1c8] sm:$0xf]
    %v161 = vld [vmem:[#allocation3 + $0x1cc] sm:$0xf]
    %v162 = vld [vmem:[#allocation3 + $0x1d0] sm:$0xf]
    %v163 = vld [vmem:[#allocation3 + $0x1d4] sm:$0xf]
    %v164 = vld [vmem:[#allocation3 + $0x1d8] sm:$0xf]
    %v165 = vld [vmem:[#allocation3 + $0x1dc] sm:$0xf]
    %v166 = vld [vmem:[#allocation3 + $0x1e0] sm:$0xf]
    %v167 = vld [vmem:[#allocation3 + $0x1e4] sm:$0xf]
    %v168 = vld [vmem:[#allocation3 + $0x1e8] sm:$0xf]
    %v169 = vld [vmem:[#allocation3 + $0x1ec] sm:$0xf]
    %v170 = vld [vmem:[#allocation3 + $0x1f0] sm:$0xf]
    %v171 = vld [vmem:[#allocation3 + $0x1f4] sm:$0xf]
    %v172 = vld [vmem:[#allocation3 + $0x1f8] sm:$0xf]
    %v173 = vld [vmem:[#allocation3 + $0x1fc] sm:$0xf]
    %v182 = vunpack.c.l.b16 %v38
    %v183 = vunpack.c.h.b16 %v38
    %v184 = vunpack.c.l.b16 %v39
    %v185 = vunpack.c.h.b16 %v39
    %v186 = vunpack.c.l.b16 %v40
    %v187 = vunpack.c.h.b16 %v40
    %v188 = vunpack.c.l.b16 %v41
    %v189 = vunpack.c.h.b16 %v41
    %v190 = vunpack.c.l.b16 %v42
    %v191 = vunpack.c.h.b16 %v42
    %v192 = vunpack.c.l.b16 %v43
    %v193 = vunpack.c.h.b16 %v43
    %v194 = vunpack.c.l.b16 %v44
    %v195 = vunpack.c.h.b16 %v44
    %v196 = vunpack.c.l.b16 %v45
    %v197 = vunpack.c.h.b16 %v45
    %v198 = vpack.c.b16 %v190, %v182
    %v199 = vpack.c.b16 %v191, %v183
    %v200 = vpack.c.b16 %v192, %v184
    %v201 = vpack.c.b16 %v193, %v185
    %v202 = vpack.c.b16 %v194, %v186
    %v203 = vpack.c.b16 %v195, %v187
    %v204 = vpack.c.b16 %v196, %v188
    %v205 = vpack.c.b16 %v197, %v189
    %v342 = vunpack.c.l.b16 %v46
    %v343 = vunpack.c.l.b16 %v47
    %v344 = vunpack.c.l.b16 %v48
    %v345 = vunpack.c.l.b16 %v49
    %v346 = vunpack.c.l.b16 %v50
    %v347 = vunpack.c.l.b16 %v51
    %v348 = vunpack.c.l.b16 %v52
    %v349 = vunpack.c.l.b16 %v53
    %v350 = vunpack.c.l.b16 %v54
    %v351 = vunpack.c.l.b16 %v55
    %v352 = vunpack.c.l.b16 %v56
    %v353 = vunpack.c.l.b16 %v57
    %v354 = vunpack.c.l.b16 %v58
    %v355 = vunpack.c.l.b16 %v59
    %v356 = vunpack.c.l.b16 %v60
    %v357 = vunpack.c.l.b16 %v61
    %v358 = vunpack.c.l.b16 %v62
    %v359 = vunpack.c.l.b16 %v63
    %v360 = vunpack.c.l.b16 %v64
    %v361 = vunpack.c.l.b16 %v65
    %v362 = vunpack.c.l.b16 %v66
    %v363 = vunpack.c.l.b16 %v67
    %v364 = vunpack.c.l.b16 %v68
    %v365 = vunpack.c.l.b16 %v69
    %v366 = vunpack.c.l.b16 %v70
    %v367 = vunpack.c.l.b16 %v71
    %v368 = vunpack.c.l.b16 %v72
    %v369 = vunpack.c.l.b16 %v73
    %v370 = vunpack.c.l.b16 %v74
    %v371 = vunpack.c.l.b16 %v75
    %v372 = vunpack.c.l.b16 %v76
    %v373 = vunpack.c.l.b16 %v77
    %v374 = vunpack.c.l.b16 %v78
    %v375 = vunpack.c.l.b16 %v79
    %v376 = vunpack.c.l.b16 %v80
    %v377 = vunpack.c.l.b16 %v81
    %v378 = vunpack.c.l.b16 %v82
    %v379 = vunpack.c.l.b16 %v83
    %v380 = vunpack.c.l.b16 %v84
    %v381 = vunpack.c.l.b16 %v85
    %v382 = vunpack.c.l.b16 %v86
    %v383 = vunpack.c.l.b16 %v87
    %v384 = vunpack.c.l.b16 %v88
    %v385 = vunpack.c.l.b16 %v89
    %v386 = vunpack.c.l.b16 %v90
    %v387 = vunpack.c.l.b16 %v91
    %v388 = vunpack.c.l.b16 %v92
    %v389 = vunpack.c.l.b16 %v93
    %v390 = vunpack.c.l.b16 %v94
    %v391 = vunpack.c.l.b16 %v95
    %v392 = vunpack.c.l.b16 %v96
    %v393 = vunpack.c.l.b16 %v97
    %v394 = vunpack.c.l.b16 %v98
    %v395 = vunpack.c.l.b16 %v99
    %v396 = vunpack.c.l.b16 %v100
    %v397 = vunpack.c.l.b16 %v101
    %v398 = vunpack.c.l.b16 %v102
    %v399 = vunpack.c.l.b16 %v103
    %v400 = vunpack.c.l.b16 %v104
    %v401 = vunpack.c.l.b16 %v105
    %v402 = vunpack.c.l.b16 %v106
    %v403 = vunpack.c.l.b16 %v107
    %v404 = vunpack.c.l.b16 %v108
    %v405 = vunpack.c.l.b16 %v109
    %v406 = vunpack.c.l.b16 %v110
    %v407 = vunpack.c.l.b16 %v111
    %v408 = vunpack.c.l.b16 %v112
    %v409 = vunpack.c.l.b16 %v113
    %v410 = vunpack.c.l.b16 %v114
    %v411 = vunpack.c.l.b16 %v115
    %v412 = vunpack.c.l.b16 %v116
    %v413 = vunpack.c.l.b16 %v117
    %v414 = vunpack.c.l.b16 %v118
    %v415 = vunpack.c.l.b16 %v119
    %v416 = vunpack.c.l.b16 %v120
    %v417 = vunpack.c.l.b16 %v121
    %v418 = vunpack.c.l.b16 %v122
    %v419 = vunpack.c.l.b16 %v123
    %v420 = vunpack.c.l.b16 %v124
    %v421 = vunpack.c.l.b16 %v125
    %v422 = vunpack.c.l.b16 %v126
    %v423 = vunpack.c.l.b16 %v127
    %v424 = vunpack.c.l.b16 %v128
    %v425 = vunpack.c.l.b16 %v129
    %v426 = vunpack.c.l.b16 %v130
    %v427 = vunpack.c.l.b16 %v131
    %v428 = vunpack.c.l.b16 %v132
    %v429 = vunpack.c.l.b16 %v133
    %v430 = vunpack.c.l.b16 %v134
    %v431 = vunpack.c.l.b16 %v135
    %v432 = vunpack.c.l.b16 %v136
    %v433 = vunpack.c.l.b16 %v137
    %v434 = vunpack.c.l.b16 %v138
    %v435 = vunpack.c.l.b16 %v139
    %v436 = vunpack.c.l.b16 %v140
    %v437 = vunpack.c.l.b16 %v141
    %v438 = vunpack.c.l.b16 %v142
    %v439 = vunpack.c.l.b16 %v143
    %v440 = vunpack.c.l.b16 %v144
    %v441 = vunpack.c.l.b16 %v145
    %v442 = vunpack.c.l.b16 %v146
    %v443 = vunpack.c.l.b16 %v147
    %v444 = vunpack.c.l.b16 %v148
    %v445 = vunpack.c.l.b16 %v149
    %v446 = vunpack.c.l.b16 %v150
    %v447 = vunpack.c.l.b16 %v151
    %v448 = vunpack.c.l.b16 %v152
    %v449 = vunpack.c.l.b16 %v153
    %v450 = vunpack.c.l.b16 %v154
    %v451 = vunpack.c.l.b16 %v155
    %v452 = vunpack.c.l.b16 %v156
    %v453 = vunpack.c.l.b16 %v157
    %v454 = vunpack.c.l.b16 %v158
    %v455 = vunpack.c.l.b16 %v159
    %v456 = vunpack.c.l.b16 %v160
    %v457 = vunpack.c.l.b16 %v161
    %v458 = vunpack.c.l.b16 %v162
    %v459 = vunpack.c.l.b16 %v163
    %v460 = vunpack.c.l.b16 %v164
    %v461 = vunpack.c.l.b16 %v165
    %v462 = vunpack.c.l.b16 %v166
    %v463 = vunpack.c.l.b16 %v167
    %v464 = vunpack.c.l.b16 %v168
    %v465 = vunpack.c.l.b16 %v169
    %v466 = vunpack.c.l.b16 %v170
    %v467 = vunpack.c.l.b16 %v171
    %v468 = vunpack.c.l.b16 %v172
    %v469 = vunpack.c.l.b16 %v173
    %v470 = vpack.c.b16 %v343, %v342
    %v471 = vpack.c.b16 %v345, %v344
    %v472 = vpack.c.b16 %v347, %v346
    %v473 = vpack.c.b16 %v349, %v348
    %v474 = vpack.c.b16 %v351, %v350
    %v475 = vpack.c.b16 %v353, %v352
    %v476 = vpack.c.b16 %v355, %v354
    %v477 = vpack.c.b16 %v357, %v356
    %v478 = vpack.c.b16 %v359, %v358
    %v479 = vpack.c.b16 %v361, %v360
    %v480 = vpack.c.b16 %v363, %v362
    %v481 = vpack.c.b16 %v365, %v364
    %v482 = vpack.c.b16 %v367, %v366
    %v483 = vpack.c.b16 %v369, %v368
    %v484 = vpack.c.b16 %v371, %v370
    %v485 = vpack.c.b16 %v373, %v372
    %v486 = vpack.c.b16 %v375, %v374
    %v487 = vpack.c.b16 %v377, %v376
    %v488 = vpack.c.b16 %v379, %v378
    %v489 = vpack.c.b16 %v381, %v380
    %v490 = vpack.c.b16 %v383, %v382
    %v491 = vpack.c.b16 %v385, %v384
    %v492 = vpack.c.b16 %v387, %v386
    %v493 = vpack.c.b16 %v389, %v388
    %v494 = vpack.c.b16 %v391, %v390
    %v495 = vpack.c.b16 %v393, %v392
    %v496 = vpack.c.b16 %v395, %v394
    %v497 = vpack.c.b16 %v397, %v396
    %v498 = vpack.c.b16 %v399, %v398
    %v499 = vpack.c.b16 %v401, %v400
    %v500 = vpack.c.b16 %v403, %v402
    %v501 = vpack.c.b16 %v405, %v404
    %v502 = vpack.c.b16 %v407, %v406
    %v503 = vpack.c.b16 %v409, %v408
    %v504 = vpack.c.b16 %v411, %v410
    %v505 = vpack.c.b16 %v413, %v412
    %v506 = vpack.c.b16 %v415, %v414
    %v507 = vpack.c.b16 %v417, %v416
    %v508 = vpack.c.b16 %v419, %v418
    %v509 = vpack.c.b16 %v421, %v420
    %v510 = vpack.c.b16 %v423, %v422
    %v511 = vpack.c.b16 %v425, %v424
    %v512 = vpack.c.b16 %v427, %v426
    %v513 = vpack.c.b16 %v429, %v428
    %v514 = vpack.c.b16 %v431, %v430
    %v515 = vpack.c.b16 %v433, %v432
    %v516 = vpack.c.b16 %v435, %v434
    %v517 = vpack.c.b16 %v437, %v436
    %v518 = vpack.c.b16 %v439, %v438
    %v519 = vpack.c.b16 %v441, %v440
    %v520 = vpack.c.b16 %v443, %v442
    %v521 = vpack.c.b16 %v445, %v444
    %v522 = vpack.c.b16 %v447, %v446
    %v523 = vpack.c.b16 %v449, %v448
    %v524 = vpack.c.b16 %v451, %v450
    %v525 = vpack.c.b16 %v453, %v452
    %v526 = vpack.c.b16 %v455, %v454
    %v527 = vpack.c.b16 %v457, %v456
    %v528 = vpack.c.b16 %v459, %v458
    %v529 = vpack.c.b16 %v461, %v460
    %v530 = vpack.c.b16 %v463, %v462
    %v531 = vpack.c.b16 %v465, %v464
    %v532 = vpack.c.b16 %v467, %v466
    %v533 = vpack.c.b16 %v469, %v468
    %598 = vmatprep.subr.bf16.mxu0 0
    %599 = vmatpush1.bf16.msra.mxu0 %v470
    %600 = vmatprep.subr.bf16.mxu0 0
    %601 = vmatpush1.bf16.msra.mxu0 %v471
    %602 = vmatprep.subr.bf16.mxu0 0
    %603 = vmatpush1.bf16.msra.mxu0 %v472
    %604 = vmatprep.subr.bf16.mxu0 0
    %605 = vmatpush1.bf16.msra.mxu0 %v473
    %606 = vmatprep.subr.bf16.mxu0 0
    %607 = vmatpush1.bf16.msra.mxu0 %v474
    %608 = vmatprep.subr.bf16.mxu0 0
    %609 = vmatpush1.bf16.msra.mxu0 %v475
    %610 = vmatprep.subr.bf16.mxu0 0
    %611 = vmatpush1.bf16.msra.mxu0 %v476
    %612 = vmatprep.subr.bf16.mxu0 0
    %613 = vmatpush1.bf16.msra.mxu0 %v477
    %614 = vmatprep.subr.bf16.mxu0 0
    %615 = vmatpush1.bf16.msra.mxu0 %v478
    %616 = vmatprep.subr.bf16.mxu0 0
    %617 = vmatpush1.bf16.msra.mxu0 %v479
    %618 = vmatprep.subr.bf16.mxu0 0
    %619 = vmatpush1.bf16.msra.mxu0 %v480
    %620 = vmatprep.subr.bf16.mxu0 0
    %621 = vmatpush1.bf16.msra.mxu0 %v481
    %622 = vmatprep.subr.bf16.mxu0 0
    %623 = vmatpush1.bf16.msra.mxu0 %v482
    %624 = vmatprep.subr.bf16.mxu0 0
    %625 = vmatpush1.bf16.msra.mxu0 %v483
    %626 = vmatprep.subr.bf16.mxu0 0
    %627 = vmatpush1.bf16.msra.mxu0 %v484
    %628 = vmatprep.subr.bf16.mxu0 0
    %629 = vmatpush1.bf16.msra.mxu0 %v485
    %630 = vmatprep.mubr.bf16.mxu0 %v199
    %631 = vmatmul.mubr.bf16.gmra.mrb[0].mxu0 %v198
    %v632 = vpop.f32.mrb[0].mxu0
    %v633 = vadd.f32 0.0, %v632
    %v634 = vpop.f32.mrb[0].mxu0
    %v635 = vpop.f32.mrb[0].mxu0
    %v636 = vadd.f32 0.0, %v635
    %v637 = vpop.f32.mrb[0].mxu0
    %638 = vdwg.mxu0
    %639 = vmatprep.subr.bf16.mxu0 0
    %640 = vmatpush1.bf16.msra.mxu0 %v486
    %641 = vmatprep.subr.bf16.mxu0 0
    %642 = vmatpush1.bf16.msra.mxu0 %v487
    %643 = vmatprep.subr.bf16.mxu0 0
    %644 = vmatpush1.bf16.msra.mxu0 %v488
    %645 = vmatprep.subr.bf16.mxu0 0
    %646 = vmatpush1.bf16.msra.mxu0 %v489
    %647 = vmatprep.subr.bf16.mxu0 0
    %648 = vmatpush1.bf16.msra.mxu0 %v490
    %649 = vmatprep.subr.bf16.mxu0 0
    %650 = vmatpush1.bf16.msra.mxu0 %v491
    %651 = vmatprep.subr.bf16.mxu0 0
    %652 = vmatpush1.bf16.msra.mxu0 %v492
    %653 = vmatprep.subr.bf16.mxu0 0
    %654 = vmatpush1.bf16.msra.mxu0 %v493
    %655 = vmatprep.subr.bf16.mxu0 0
    %656 = vmatpush1.bf16.msra.mxu0 %v494
    %657 = vmatprep.subr.bf16.mxu0 0
    %658 = vmatpush1.bf16.msra.mxu0 %v495
    %659 = vmatprep.subr.bf16.mxu0 0
    %660 = vmatpush1.bf16.msra.mxu0 %v496
    %661 = vmatprep.subr.bf16.mxu0 0
    %662 = vmatpush1.bf16.msra.mxu0 %v497
    %663 = vmatprep.subr.bf16.mxu0 0
    %664 = vmatpush1.bf16.msra.mxu0 %v498
    %665 = vmatprep.subr.bf16.mxu0 0
    %666 = vmatpush1.bf16.msra.mxu0 %v499
    %667 = vmatprep.subr.bf16.mxu0 0
    %668 = vmatpush1.bf16.msra.mxu0 %v500
    %669 = vmatprep.subr.bf16.mxu0 0
    %670 = vmatpush1.bf16.msra.mxu0 %v501
    %671 = vmatprep.mubr.bf16.mxu0 %v201
    %672 = vmatmul.mubr.bf16.gmra.mrb[0].mxu0 %v200
    %v673 = vpop.f32.mrb[0].mxu0
    %v674 = vadd.f32 %v633, %v673
    %v675 = vpop.f32.mrb[0].mxu0
    %v676 = vpop.f32.mrb[0].mxu0
    %v677 = vadd.f32 %v636, %v676
    %v678 = vpop.f32.mrb[0].mxu0
    %679 = vdwg.mxu0
    %680 = vmatprep.subr.bf16.mxu0 0
    %681 = vmatpush1.bf16.msra.mxu0 %v502
    %682 = vmatprep.subr.bf16.mxu0 0
    %683 = vmatpush1.bf16.msra.mxu0 %v503
    %684 = vmatprep.subr.bf16.mxu0 0
    %685 = vmatpush1.bf16.msra.mxu0 %v504
    %686 = vmatprep.subr.bf16.mxu0 0
    %687 = vmatpush1.bf16.msra.mxu0 %v505
    %688 = vmatprep.subr.bf16.mxu0 0
    %689 = vmatpush1.bf16.msra.mxu0 %v506
    %690 = vmatprep.subr.bf16.mxu0 0
    %691 = vmatpush1.bf16.msra.mxu0 %v507
    %692 = vmatprep.subr.bf16.mxu0 0
    %693 = vmatpush1.bf16.msra.mxu0 %v508
    %694 = vmatprep.subr.bf16.mxu0 0
    %695 = vmatpush1.bf16.msra.mxu0 %v509
    %696 = vmatprep.subr.bf16.mxu0 0
    %697 = vmatpush1.bf16.msra.mxu0 %v510
    %698 = vmatprep.subr.bf16.mxu0 0
    %699 = vmatpush1.bf16.msra.mxu0 %v511
    %700 = vmatprep.subr.bf16.mxu0 0
    %701 = vmatpush1.bf16.msra.mxu0 %v512
    %702 = vmatprep.subr.bf16.mxu0 0
    %703 = vmatpush1.bf16.msra.mxu0 %v513
    %704 = vmatprep.subr.bf16.mxu0 0
    %705 = vmatpush1.bf16.msra.mxu0 %v514
    %706 = vmatprep.subr.bf16.mxu0 0
    %707 = vmatpush1.bf16.msra.mxu0 %v515
    %708 = vmatprep.subr.bf16.mxu0 0
    %709 = vmatpush1.bf16.msra.mxu0 %v516
    %710 = vmatprep.subr.bf16.mxu0 0
    %711 = vmatpush1.bf16.msra.mxu0 %v517
    %712 = vmatprep.mubr.bf16.mxu0 %v203
    %713 = vmatmul.mubr.bf16.gmra.mrb[0].mxu0 %v202
    %v714 = vpop.f32.mrb[0].mxu0
    %v715 = vadd.f32 %v674, %v714
    %v716 = vpop.f32.mrb[0].mxu0
    %v717 = vpop.f32.mrb[0].mxu0
    %v718 = vadd.f32 %v677, %v717
    %v719 = vpop.f32.mrb[0].mxu0
    %720 = vdwg.mxu0
    %721 = vmatprep.subr.bf16.mxu0 0
    %722 = vmatpush1.bf16.msra.mxu0 %v518
    %723 = vmatprep.subr.bf16.mxu0 0
    %724 = vmatpush1.bf16.msra.mxu0 %v519
    %725 = vmatprep.subr.bf16.mxu0 0
    %726 = vmatpush1.bf16.msra.mxu0 %v520
    %727 = vmatprep.subr.bf16.mxu0 0
    %728 = vmatpush1.bf16.msra.mxu0 %v521
    %729 = vmatprep.subr.bf16.mxu0 0
    %730 = vmatpush1.bf16.msra.mxu0 %v522
    %731 = vmatprep.subr.bf16.mxu0 0
    %732 = vmatpush1.bf16.msra.mxu0 %v523
    %733 = vmatprep.subr.bf16.mxu0 0
    %734 = vmatpush1.bf16.msra.mxu0 %v524
    %735 = vmatprep.subr.bf16.mxu0 0
    %736 = vmatpush1.bf16.msra.mxu0 %v525
    %737 = vmatprep.subr.bf16.mxu0 0
    %738 = vmatpush1.bf16.msra.mxu0 %v526
    %739 = vmatprep.subr.bf16.mxu0 0
    %740 = vmatpush1.bf16.msra.mxu0 %v527
    %741 = vmatprep.subr.bf16.mxu0 0
    %742 = vmatpush1.bf16.msra.mxu0 %v528
    %743 = vmatprep.subr.bf16.mxu0 0
    %744 = vmatpush1.bf16.msra.mxu0 %v529
    %745 = vmatprep.subr.bf16.mxu0 0
    %746 = vmatpush1.bf16.msra.mxu0 %v530
    %747 = vmatprep.subr.bf16.mxu0 0
    %748 = vmatpush1.bf16.msra.mxu0 %v531
    %749 = vmatprep.subr.bf16.mxu0 0
    %750 = vmatpush1.bf16.msra.mxu0 %v532
    %751 = vmatprep.subr.bf16.mxu0 0
    %752 = vmatpush1.bf16.msra.mxu0 %v533
    %753 = vmatprep.mubr.bf16.mxu0 %v205
    %754 = vmatmul.mubr.bf16.gmra.mrb[0].mxu0 %v204
    %v755 = vpop.f32.mrb[0].mxu0
    %v756 = vadd.f32 %v715, %v755
    %v757 = vpop.f32.mrb[0].mxu0
    %v758 = vpop.f32.mrb[0].mxu0
    %v759 = vadd.f32 %v718, %v758
    %v760 = vpop.f32.mrb[0].mxu0
    %761 = vdwg.mxu0
    %p762 = scmp.eq.s32.totalorder 0, 0
    // Predicated region
    $region30: #{classification_forward.1} parent=1 // pred_check
      %p763 = pneg %p762
    $region31: #{classification_forward.1} parent=1 // pred_check_branch
      %765 = sbr.rel (%p763) target = $region33
    $region32: #{classification_forward.1} parent=1 // pred_region
      %766 = vst [vmem:[#allocation2] sm:$0xff] %v756
      %767 = vst [vmem:[#allocation2 + $0x8] sm:$0xff] %v759
    $region33: #{classification_forward.1} parent=1 // pred_fallthru
      _
    %p768 = scmp.gt.s32.totalorder 0, 0
    // Predicated region
    $region34: #{classification_forward.1} parent=1 // pred_check
      %p769 = pneg %p768
    $region35: #{classification_forward.1} parent=1 // pred_check_branch
      %771 = sbr.rel (%p769) target = $region37
    $region36: #{classification_forward.1} parent=1 // pred_region
      %v772 = vld [vmem:[#allocation2] sm:$0xff]
      %v773 = vld [vmem:[#allocation2 + $0x8] sm:$0xff]
      %v774 = vadd.f32 %v772, %v756
      %v775 = vadd.f32 %v773, %v759
      %776 = vst [vmem:[#allocation2] sm:$0xff] %v774
      %777 = vst [vmem:[#allocation2 + $0x8] sm:$0xff] %v775
    $region37: #{classification_forward.1} parent=1 // pred_fallthru
      _
    // Predicated region
    $region38: #{classification_forward.1} parent=1 // pred_check
      %p778 = pneg %p762
    $region39: #{classification_forward.1} parent=1 // pred_check_branch
      %780 = sbr.rel (%p778) target = $region41
    $region40: #{classification_forward.1} parent=1 // pred_region
      %v781 = vld [vmem:[#allocation2] sm:$0xff]
      %v782 = vld [vmem:[#allocation2 + $0x8] sm:$0xff]
      %v783 = vld [vmem:[%s2] sm:$0x1]
      %v785 = vlaneseq
      %v786 = vshrl.u32 %v785, 7
      %v787 = vsub.s32 0, %v786
      %v788 = vrot.slane %v783, %v787
      %v790 = vadd.f32 %v781, %v788
      %v791 = vadd.f32 %v782, %v788
      %v792 = vmax.f32 %v790, 0.0
      %v793 = vmax.f32 %v791, 0.0
      %v794 = vpack.c.bf16 %v793, %v792
      %v795 = vld [vmem:[%s3] sm:$0xf]
      %v796 = vld [vmem:[%s3 + $0x4] sm:$0xf]
      %v797 = vld [vmem:[%s3 + $0x8] sm:$0xf]
      %v798 = vld [vmem:[%s3 + $0xc] sm:$0xf]
      %v799 = vld [vmem:[%s3 + $0x10] sm:$0xf]
      %v800 = vld [vmem:[%s3 + $0x14] sm:$0xf]
      %v801 = vld [vmem:[%s3 + $0x18] sm:$0xf]
      %v802 = vld [vmem:[%s3 + $0x1c] sm:$0xf]
      %v803 = vld [vmem:[%s3 + $0x20] sm:$0xf]
      %v804 = vld [vmem:[%s3 + $0x24] sm:$0xf]
      %v805 = vld [vmem:[%s3 + $0x28] sm:$0xf]
      %v806 = vld [vmem:[%s3 + $0x2c] sm:$0xf]
      %v807 = vld [vmem:[%s3 + $0x30] sm:$0xf]
      %v808 = vld [vmem:[%s3 + $0x34] sm:$0xf]
      %v809 = vld [vmem:[%s3 + $0x38] sm:$0xf]
      %v810 = vld [vmem:[%s3 + $0x3c] sm:$0xf]
      %v811 = vld [vmem:[%s4] sm:$0x1]
      %v813 = vlaneseq
      %v814 = vshrl.u32 %v813, 7
      %v815 = vsub.s32 0, %v814
      %v816 = vrot.slane %v811, %v815
      %v834 = vunpack.c.l.b16 %v795
      %v835 = vunpack.c.l.b16 %v796
      %v836 = vunpack.c.l.b16 %v797
      %v837 = vunpack.c.l.b16 %v798
      %v838 = vunpack.c.l.b16 %v799
      %v839 = vunpack.c.l.b16 %v800
      %v840 = vunpack.c.l.b16 %v801
      %v841 = vunpack.c.l.b16 %v802
      %v842 = vunpack.c.l.b16 %v803
      %v843 = vunpack.c.l.b16 %v804
      %v844 = vunpack.c.l.b16 %v805
      %v845 = vunpack.c.l.b16 %v806
      %v846 = vunpack.c.l.b16 %v807
      %v847 = vunpack.c.l.b16 %v808
      %v848 = vunpack.c.l.b16 %v809
      %v849 = vunpack.c.l.b16 %v810
      %v850 = vpack.c.b16 %v835, %v834
      %v851 = vpack.c.b16 %v837, %v836
      %v852 = vpack.c.b16 %v839, %v838
      %v853 = vpack.c.b16 %v841, %v840
      %v854 = vpack.c.b16 %v843, %v842
      %v855 = vpack.c.b16 %v845, %v844
      %v856 = vpack.c.b16 %v847, %v846
      %v857 = vpack.c.b16 %v849, %v848
      %866 = vmatprep.subr.bf16.mxu0 0
      %867 = vmatpush1.bf16.msra.mxu0 %v850
      %868 = vmatprep.subr.bf16.mxu0 0
      %869 = vmatpush1.bf16.msra.mxu0 %v851
      %870 = vmatprep.subr.bf16.mxu0 0
      %871 = vmatpush1.bf16.msra.mxu0 %v852
      %872 = vmatprep.subr.bf16.mxu0 0
      %873 = vmatpush1.bf16.msra.mxu0 %v853
      %874 = vmatprep.subr.bf16.mxu0 0
      %875 = vmatpush1.bf16.msra.mxu0 %v854
      %876 = vmatprep.subr.bf16.mxu0 0
      %877 = vmatpush1.bf16.msra.mxu0 %v855
      %878 = vmatprep.subr.bf16.mxu0 0
      %879 = vmatpush1.bf16.msra.mxu0 %v856
      %880 = vmatprep.subr.bf16.mxu0 0
      %881 = vmatpush1.bf16.msra.mxu0 %v857
      %882 = vmatprep.subr.bf16.mxu0 0
      %883 = vmatpush1.bf16.msra.mxu0 0
      %884 = vmatprep.subr.bf16.mxu0 0
      %885 = vmatpush1.bf16.msra.mxu0 0
      %886 = vmatprep.subr.bf16.mxu0 0
      %887 = vmatpush1.bf16.msra.mxu0 0
      %888 = vmatprep.subr.bf16.mxu0 0
      %889 = vmatpush1.bf16.msra.mxu0 0
      %890 = vmatprep.subr.bf16.mxu0 0
      %891 = vmatpush1.bf16.msra.mxu0 0
      %892 = vmatprep.subr.bf16.mxu0 0
      %893 = vmatpush1.bf16.msra.mxu0 0
      %894 = vmatprep.subr.bf16.mxu0 0
      %895 = vmatpush1.bf16.msra.mxu0 0
      %896 = vmatprep.subr.bf16.mxu0 0
      %897 = vmatpush1.bf16.msra.mxu0 0
      %898 = vmatprep.mubr.bf16.mxu0 0
      %899 = vmatmul.mubr.bf16.gmra.mrb[0].mxu0 %v794
      %v900 = vpop.f32.mrb[0].mxu0
      %v901 = vadd.f32 %v816, %v900
      %v902 = vpop.f32.mrb[0].mxu0
      %v903 = vpop.f32.mrb[0].mxu0
      %v904 = vadd.f32 %v816, %v903
      %v905 = vpop.f32.mrb[0].mxu0
      %906 = vdwg.mxu0
      %907 = vmax.xlane.f32.xlu0 %v901
      %v908 = vpop.xlane.xlu0 %907
      %909 = vmax.xlane.f32.xlu0 %v904
      %v910 = vpop.xlane.xlu0 %909
      %v911 = vsub.f32 %v901, %v908
      %v912 = vsub.f32 %v904, %v910
      %v913 = vmul.f32 %v911, 1.442695
      %v914 = vpow.pop %v913
      %v915 = vmul.f32 %v912, 1.442695
      %v916 = vpow.pop %v915
      %917 = vadd.xlane.f32.xlu0 %v914
      %v918 = vpop.xlane.xlu0 %917
      %919 = vadd.xlane.f32.xlu0 %v916
      %v920 = vpop.xlane.xlu0 %919
      %v921 = vlog2.pop %v918
      %v922 = vmul.f32 %v921, 0.6931472
      %v923 = vlog2.pop %v920
      %v924 = vmul.f32 %v923, 0.6931472
      %v925 = vadd.f32 %v908, %v922
      %v926 = vadd.f32 %v910, %v924
      %v927 = vld [vmem:[%s5] sm:$0xff]
      %v928 = vld [vmem:[%s5 + $0x8] sm:$0xff]
      %v929 = vlaneseq
      %v930 = vand.u32 %v929, 127
      %931 = vset.pattern.permute.xlu0 0
      %932 = vperm.xlu0 %931, %v927
      %v933 = vpop.permute.xlu0 %932
      %934 = vset.pattern.permute.xlu0 0
      %935 = vperm.xlu0 %934, %v928
      %v936 = vpop.permute.xlu0 %935
      %vm937 = vcmp.eq.s32.totalorder %v930, %v933
      %vm938 = vcmp.eq.s32.totalorder %v930, %v936
      %v939 = vsel %vm937, %v901, 0.0
      %v940 = vsel %vm938, %v904, 0.0
      %941 = vadd.xlane.f32.xlu0 %v939
      %v942 = vpop.xlane.xlu0 %941
      %943 = vadd.xlane.f32.xlu0 %v940
      %v944 = vpop.xlane.xlu0 %943
      %v945 = vsub.f32 %v925, %v942
      %v946 = vsub.f32 %v926, %v944
      %947 = vst [vmem:[%s6] sm:$0xff] %v945
      %948 = vst [vmem:[%s6 + $0x8] sm:$0xff] %v946
    $region41: #{classification_forward.1} parent=1 // pred_fallthru
      _
    // Predicated region
    $region42: #{classification_forward.1} parent=1 // pred_check
      _
    $region43: #{classification_forward.1} parent=1 // pred_check_branch
      %950 = sbr.rel (0) target = $region45
    $region44: #{classification_forward.1} parent=1 // pred_region
      _
    $region45: #{classification_forward.1} parent=1 // pred_fallthru
      _
    // Predicated region
    $region46: #{classification_forward.1} parent=1 // pred_check
      _
    $region47: #{classification_forward.1} parent=1 // pred_check_branch
      %952 = sbr.rel (0) target = $region49
    $region48: #{classification_forward.1} parent=1 // pred_region
      _
    $region49: #{classification_forward.1} parent=1 // pred_fallthru
      _
    %953 = vsyncpa [#allocation4], 1

</llo_original>
